<compile_context>
chip_gen: v7x
topology: tpu7x:2x2x1
jax: 0.10.0
libtpu: 0.0.40
codegen_flags: <defaults>
</compile_context>

<pallas_src>
import jax
import jax.numpy as jnp
from jax.experimental import pallas as pl
from jax.experimental.pallas import tpu as pltpu


def _round_up(x: int, m: int) -> int:
    return ((x + m - 1) // m) * m


def vision_mlp_kernel(x_ref, w1_ref, b1_ref, w2_ref, b2_ref, o_ref):
    # x_ref : (tile_n, Dp)   w1_ref: (Dp, Hp)   b1_ref: (1, Hp)
    # w2_ref: (Hp, Dp)       b2_ref: (1, Dp)    o_ref : (tile_n, Dp)
    h = jnp.dot(x_ref[...], w1_ref[...], preferred_element_type=jnp.float32)
    h = h + b1_ref[...].astype(jnp.float32)
    h = h * jax.nn.sigmoid(h)                      # SiLU (sigmoid -> EUP slot)
    y = jnp.dot(h.astype(w2_ref.dtype), w2_ref[...],
                preferred_element_type=jnp.float32)
    y = y + b2_ref[...].astype(jnp.float32)
    o_ref[...] = y.astype(o_ref.dtype)


def vision_mlp_pallas(x_pad, w1_t, b1_row, w2_t, b2_row, *, tile_n,
                      out_dtype=jnp.float32):
    """x_pad: (Np, Dp) padded rows/cols.  Weights already padded & transposed.

    w1_t: (Dp, Hp), b1_row: (1, Hp), w2_t: (Hp, Dp), b2_row: (1, Dp).
    Returns (Np, Dp) in out_dtype.
    """
    Np, Dp = x_pad.shape
    Hp = w1_t.shape[1]
    assert Np % tile_n == 0 and Dp % 128 == 0 and Hp % 128 == 0

    grid = (Np // tile_n,)
    in_bytes = jnp.dtype(x_pad.dtype).itemsize
    out_bytes = jnp.dtype(out_dtype).itemsize

    # VMEM budget: resident weights/biases + double-buffered x & out tiles
    # + f32 hidden intermediate, with headroom.  Clamped so it is safe on
    # v7x's 64 MiB physical VMEM while still allowing big tiles elsewhere.
    vmem_needed = (
        (Dp * Hp + Hp * Dp + Hp + Dp) * in_bytes          # resident weights
        + 2 * tile_n * Dp * in_bytes                      # x double-buffer
        + 2 * tile_n * Dp * out_bytes                     # out double-buffer
        + tile_n * Hp * 4 + tile_n * Dp * 4               # f32 intermediates
        + (4 << 20)                                       # headroom
    )
    vmem_limit = int(min(max(vmem_needed, 16 << 20), 48 << 20))

    cost = pl.CostEstimate(
        flops=int(4 * Np * Dp * Hp),                      # two matmuls
        transcendentals=int(Np * Hp),                     # sigmoid
        bytes_accessed=int(
            Np * Dp * in_bytes + Np * Dp * out_bytes
            + (Dp * Hp + Hp * Dp + Hp + Dp) * in_bytes
        ),
    )

    return pl.pallas_call(
        vision_mlp_kernel,
        out_shape=jax.ShapeDtypeStruct((Np, Dp), out_dtype),
        grid_spec=pltpu.PrefetchScalarGridSpec(
            num_scalar_prefetch=0,
            grid=grid,
            in_specs=[
                pl.BlockSpec((tile_n, Dp), lambda i: (i, 0)),   # x row tile
                pl.BlockSpec((Dp, Hp), lambda i: (0, 0)),       # W1^T resident
                pl.BlockSpec((1, Hp), lambda i: (0, 0)),        # b1 resident
                pl.BlockSpec((Hp, Dp), lambda i: (0, 0)),       # W2^T resident
                pl.BlockSpec((1, Dp), lambda i: (0, 0)),        # b2 resident
            ],
            out_specs=pl.BlockSpec((tile_n, Dp), lambda i: (i, 0)),
        ),
        compiler_params=pltpu.CompilerParams(
            dimension_semantics=("parallel",),
            vmem_limit_bytes=vmem_limit,
        ),
        cost_estimate=cost,
    )(x_pad, w1_t, b1_row, w2_t, b2_row)


class VisionMlpJax:
    """JAX/Pallas equivalent of the PyTorch VisionMlp module."""

    def __init__(self, dim: int, hidden_dim: int, hidden_act: str = "silu",
                 key=None, compute_dtype=jnp.bfloat16):
        # hidden_act kept for signature parity; the reference module hard-codes SiLU.
        self.dim = dim
        self.hidden_dim = hidden_dim
        self.compute_dtype = compute_dtype
        if key is None:
            key = jax.random.PRNGKey(0)
        k1, k2, k3, k4 = jax.random.split(key, 4)

        # nn.Linear-style uniform init, stored in f32 as the "true" params.
        bound1 = 1.0 / (dim ** 0.5)
        self.w1 = jax.random.uniform(k1, (hidden_dim, dim), jnp.float32,
                                     -bound1, bound1)
        self.b1 = jax.random.uniform(k2, (hidden_dim,), jnp.float32,
                                     -bound1, bound1)
        bound2 = 1.0 / (hidden_dim ** 0.5)
        self.w2 = jax.random.uniform(k3, (dim, hidden_dim), jnp.float32,
                                     -bound2, bound2)
        self.b2 = jax.random.uniform(k4, (dim,), jnp.float32,
                                     -bound2, bound2)

        # Hoisted out of __call__: lane-dense (128-padded), pre-transposed,
        # pre-cast operands the kernel consumes directly.
        Dp = _round_up(dim, 128)
        Hp = _round_up(hidden_dim, 128)
        self.dim_p, self.hidden_p = Dp, Hp
        dt = compute_dtype
        self.w1_t = (jnp.zeros((Dp, Hp), dt)
                     .at[:dim, :hidden_dim].set(self.w1.T.astype(dt)))
        self.b1_row = (jnp.zeros((1, Hp), dt)
                       .at[0, :hidden_dim].set(self.b1.astype(dt)))
        self.w2_t = (jnp.zeros((Hp, Dp), dt)
                     .at[:hidden_dim, :dim].set(self.w2.T.astype(dt)))
        self.b2_row = (jnp.zeros((1, Dp), dt)
                       .at[0, :dim].set(self.b2.astype(dt)))

    def __call__(self, x):
        lead = x.shape[:-1]
        x2 = x.reshape(-1, self.dim).astype(self.compute_dtype)
        N = x2.shape[0]

        # Row tile: large (up to 256) and sublane-aligned (16 for bf16, 8 for f32),
        # keeping >=2 grid steps for realistic N so v7x's 2 TCs both get work.
        sub = 16 if self.compute_dtype == jnp.bfloat16 else 8
        tile_n = max(sub, min(256, _round_up(N, sub)))
        N_pad = _round_up(N, tile_n)

        x_pad = (jnp.zeros((N_pad, self.dim_p), self.compute_dtype)
                 .at[:N, :self.dim].set(x2))

        out = vision_mlp_pallas(
            x_pad, self.w1_t, self.b1_row, self.w2_t, self.b2_row,
            tile_n=tile_n, out_dtype=jnp.float32,
        )
        return out[:N, :self.dim].reshape(*lead, self.dim)


if __name__ == "__main__":
    # Small shapes consistent with the module: (batch=2, seq=8, dim=32), hidden=64.
    dim, hidden_dim = 32, 64
    batch, seq = 2, 8

    key = jax.random.PRNGKey(0)
    k_params, k_x = jax.random.split(key)

    mlp = VisionMlpJax(dim, hidden_dim, "silu", key=k_params,
                       compute_dtype=jnp.bfloat16)

    x = jax.random.normal(k_x, (batch, seq, dim), dtype=jnp.float32)

    out = mlp(x)
    out = jax.block_until_ready(out)

    # Pure-JAX f32 reference (highest precision matmuls).
    x2 = x.reshape(-1, dim)
    h = jnp.dot(x2, mlp.w1.T, precision=jax.lax.Precision.HIGHEST) + mlp.b1
    h = h * jax.nn.sigmoid(h)
    ref = jnp.dot(h, mlp.w2.T, precision=jax.lax.Precision.HIGHEST) + mlp.b2
    ref = ref.reshape(batch, seq, dim)

    assert out.shape == (batch, seq, dim)
    # bf16 operands with f32 accumulation -> relaxed tolerance.
    assert jnp.allclose(out, ref, atol=5e-2, rtol=5e-2), (
        float(jnp.max(jnp.abs(out - ref))))

    print("KERNEL_OK")
</pallas_src>

<mosaic_0001>
module attributes {stable_mosaic.version = 11 : i64} {
  func.func @vision_mlp_kernel(%arg0: i32, %arg1: memref<16x128xbf16, #tpu.memory_space<vmem>>, %arg2: memref<128x128xbf16, #tpu.memory_space<vmem>>, %arg3: memref<1x128xbf16, #tpu.memory_space<vmem>>, %arg4: memref<128x128xbf16, #tpu.memory_space<vmem>>, %arg5: memref<1x128xbf16, #tpu.memory_space<vmem>>, %arg6: memref<16x128xf32, #tpu.memory_space<vmem>>) attributes {dimension_semantics = [#tpu.dimension_semantics<parallel>], iteration_bounds = array<i64: 1>, scalar_prefetch = 0 : i64, scratch_operands = 0 : i64, tpu.core_type = #tpu.core_type<tc>, window_params = [{transform_indices = @transform_0, window_bounds = array<i64: 16, 128>}, {pipeline_mode = #tpu.pipeline_mode<synchronous>, transform_indices = @transform_1, window_bounds = array<i64: 128, 128>}, {pipeline_mode = #tpu.pipeline_mode<synchronous>, transform_indices = @transform_2, window_bounds = array<i64: 1, 128>}, {pipeline_mode = #tpu.pipeline_mode<synchronous>, transform_indices = @transform_3, window_bounds = array<i64: 128, 128>}, {pipeline_mode = #tpu.pipeline_mode<synchronous>, transform_indices = @transform_4, window_bounds = array<i64: 1, 128>}, {transform_indices = @transform_5, window_bounds = array<i64: 16, 128>}]} {
    %c0 = arith.constant 0 : index
    %c0_0 = arith.constant 0 : index
    %0 = vector.load %arg1[%c0, %c0_0] : memref<16x128xbf16, #tpu.memory_space<vmem>>, vector<16x128xbf16>
    %c0_1 = arith.constant 0 : index
    %c0_2 = arith.constant 0 : index
    %1 = vector.load %arg2[%c0_1, %c0_2] : memref<128x128xbf16, #tpu.memory_space<vmem>>, vector<128x128xbf16>
    %cst = arith.constant dense<0.000000e+00> : vector<16x128xf32>
    %2 = tpu.matmul %0, %1, %cst {dimension_numbers = #tpu.dot_dimension_numbers<[1], [0], [0], [1], [0, 0, 1, 1], [], []>} : vector<16x128xbf16>, vector<128x128xbf16>, vector<16x128xf32> -> vector<16x128xf32>
    %c0_3 = arith.constant 0 : index
    %c0_4 = arith.constant 0 : index
    %3 = vector.load %arg3[%c0_3, %c0_4] : memref<1x128xbf16, #tpu.memory_space<vmem>>, vector<1x128xbf16>
    %4 = arith.extf %3 : vector<1x128xbf16> to vector<1x128xf32>
    %5 = vector.broadcast %4 : vector<1x128xf32> to vector<16x128xf32>
    %6 = arith.addf %2, %5 : vector<16x128xf32>
    %7 = arith.negf %6 : vector<16x128xf32>
    %8 = math.exp %7 : vector<16x128xf32>
    %cst_5 = arith.constant 1.000000e+00 : f32
    %9 = vector.broadcast %cst_5 : f32 to vector<16x128xf32>
    %10 = arith.addf %9, %8 : vector<16x128xf32>
    %11 = arith.divf %9, %10 : vector<16x128xf32>
    %12 = arith.mulf %6, %11 : vector<16x128xf32>
    %13 = arith.truncf %12 : vector<16x128xf32> to vector<16x128xbf16>
    %c0_6 = arith.constant 0 : index
    %c0_7 = arith.constant 0 : index
    %14 = vector.load %arg4[%c0_6, %c0_7] : memref<128x128xbf16, #tpu.memory_space<vmem>>, vector<128x128xbf16>
    %cst_8 = arith.constant dense<0.000000e+00> : vector<16x128xf32>
    %15 = tpu.matmul %13, %14, %cst_8 {dimension_numbers = #tpu.dot_dimension_numbers<[1], [0], [0], [1], [0, 0, 1, 1], [], []>} : vector<16x128xbf16>, vector<128x128xbf16>, vector<16x128xf32> -> vector<16x128xf32>
    %c0_9 = arith.constant 0 : index
    %c0_10 = arith.constant 0 : index
    %16 = vector.load %arg5[%c0_9, %c0_10] : memref<1x128xbf16, #tpu.memory_space<vmem>>, vector<1x128xbf16>
    %17 = arith.extf %16 : vector<1x128xbf16> to vector<1x128xf32>
    %18 = vector.broadcast %17 : vector<1x128xf32> to vector<16x128xf32>
    %19 = arith.addf %15, %18 : vector<16x128xf32>
    %c0_11 = arith.constant 0 : index
    %c0_12 = arith.constant 0 : index
    %20 = vector.load %arg6[%c0_11, %c0_12] : memref<16x128xf32, #tpu.memory_space<vmem>>, vector<16x128xf32>
    tpu.vector_store %arg6[%c0_11, %c0_12], %19 {strides = array<i32>} : memref<16x128xf32, #tpu.memory_space<vmem>>, vector<16x128xf32>,
    return
  }
  func.func @transform_0(%arg0: i32) -> (i32, i32) {
    %c0_i32 = arith.constant 0 : i32
    %c0_i32_0 = arith.constant 0 : i32
    return %arg0, %c0_i32 : i32, i32
  }
  func.func @transform_1(%arg0: i32) -> (i32, i32) {
    %c0_i32 = arith.constant 0 : i32
    %c0_i32_0 = arith.constant 0 : i32
    %c0_i32_1 = arith.constant 0 : i32
    return %c0_i32, %c0_i32_0 : i32, i32
  }
  func.func @transform_2(%arg0: i32) -> (i32, i32) {
    %c0_i32 = arith.constant 0 : i32
    %c0_i32_0 = arith.constant 0 : i32
    %c0_i32_1 = arith.constant 0 : i32
    return %c0_i32, %c0_i32_0 : i32, i32
  }
  func.func @transform_3(%arg0: i32) -> (i32, i32) {
    %c0_i32 = arith.constant 0 : i32
    %c0_i32_0 = arith.constant 0 : i32
    %c0_i32_1 = arith.constant 0 : i32
    return %c0_i32, %c0_i32_0 : i32, i32
  }
  func.func @transform_4(%arg0: i32) -> (i32, i32) {
    %c0_i32 = arith.constant 0 : i32
    %c0_i32_0 = arith.constant 0 : i32
    %c0_i32_1 = arith.constant 0 : i32
    return %c0_i32, %c0_i32_0 : i32, i32
  }
  func.func @transform_5(%arg0: i32) -> (i32, i32) {
    %c0_i32 = arith.constant 0 : i32
    %c0_i32_0 = arith.constant 0 : i32
    return %arg0, %c0_i32 : i32, i32
  }
}

</mosaic_0001>

<llo_original>
// kernel: tpu_custom_call.1
$region0: #{tpu_custom_call.1}
  #allocation0 [shape = 'u32[]', space=smem, size = 0x4, offset = 0x4, fixed_abs, tag = 'smem constant byte address 0x4 - core index']
  #allocation1 [shape = 'u32[144,128]{1,0:T(1,128)}', space=vmem, size = 0x12000, scoped, tag = 'internal scratch']
  %s0 = inlined_call_operand.hbm [shape: bf16[16,128], index: 0, kind: input, shape index: {}]
  %s1 = inlined_call_operand.hbm [shape: bf16[128,128], index: 1, kind: input, shape index: {}]
  %s2 = inlined_call_operand.vmem [shape: bf16[1,128], index: 2, kind: input, shape index: {}]
  %s3 = inlined_call_operand.hbm [shape: bf16[128,128], index: 3, kind: input, shape index: {}]
  %s4 = inlined_call_operand.vmem [shape: bf16[1,128], index: 4, kind: input, shape index: {}]
  %s5 = inlined_call_operand.hbm [shape: f32[16,128], index: 5, kind: output, shape index: {}]
  %s6 = sld [smem:[#allocation0]]
  $region42: #{tpu_custom_call.1} parent=0
    _
  %s8 = ssub.s32 1, %s6
  %s9 = scalar_select 0, %s8, %s6
  $region1: #{tpu_custom_call.1} parent=0
    #allocation2 [shape = 'u8[4096]{0}', space=vmem, size = 0x1000, scoped, tag = 'input window, operand 0, single buffered']
    #allocation3 [shape = 's32[1]{0}', space=sflag, size = 0x4, scoped, tag = 'scoped memory for tpu_custom_call.1']
    #allocation4 [shape = 's32[1]{0}', space=sflag, size = 0x4, scoped, tag = 'scoped memory for tpu_custom_call.1']
    #allocation5 [shape = 'u8[32768]{0}', space=vmem, size = 0x8000, scoped, tag = 'input window, operand 1, single buffered']
    #allocation6 [shape = 's32[1]{0}', space=sflag, size = 0x4, scoped, tag = 'scoped memory for tpu_custom_call.1']
    #allocation7 [shape = 'u8[32768]{0}', space=vmem, size = 0x8000, scoped, tag = 'input window, operand 3, single buffered']
    #allocation8 [shape = 'u8[8192]{0}', space=vmem, size = 0x2000, scoped, tag = 'output window, operand 0, single buffered']
    %10 = vsyncpa [#allocation3], 0
    %11 = vsyncpa [#allocation6], 0
    %12 = vsyncpa [#allocation4], 0
    // Predicated region
    $region2: #{tpu_custom_call.1} parent=1 // pred_check
      _
    $region3: #{tpu_custom_call.1} parent=1 // pred_check_branch
      %14 = sbr.rel (0) target = $region5
    $region4: #{tpu_custom_call.1} parent=1 // pred_region
      %s16 = ssub.s32 128, 128
      %17 = vsyncadd [#allocation3], %s16
      %s18 = sshll.u32 [#allocation2], 4
      %s19 = int_to_ptr.vmem [resolvable:$true] %s18
      %24 = dma.hbm_to_vmem [thread:$0]  %s0, 128, %s19, [#allocation3], 64, 64, 4
    $region5: #{tpu_custom_call.1} parent=1 // pred_fallthru
      _
    // Predicated region
    $region6: #{tpu_custom_call.1} parent=1 // pred_check
      _
    $region7: #{tpu_custom_call.1} parent=1 // pred_check_branch
      %26 = sbr.rel (0) target = $region9
    $region8: #{tpu_custom_call.1} parent=1 // pred_region
      %s28 = ssub.s32 1024, 1024
      %29 = vsyncadd [#allocation6], %s28
      %s30 = sshll.u32 [#allocation5], 4
      %s31 = int_to_ptr.vmem [resolvable:$true] %s30
      %36 = dma.hbm_to_vmem [thread:$0]  %s1, 1024, %s31, [#allocation6], 64, 64, 4
    $region9: #{tpu_custom_call.1} parent=1 // pred_fallthru
      _
    // Predicated region
    $region10: #{tpu_custom_call.1} parent=1 // pred_check
      _
    $region11: #{tpu_custom_call.1} parent=1 // pred_check_branch
      %38 = sbr.rel (0) target = $region13
    $region12: #{tpu_custom_call.1} parent=1 // pred_region
      _
    $region13: #{tpu_custom_call.1} parent=1 // pred_fallthru
      _
    // Predicated region
    $region14: #{tpu_custom_call.1} parent=1 // pred_check
      _
    $region15: #{tpu_custom_call.1} parent=1 // pred_check_branch
      %40 = sbr.rel (0) target = $region17
    $region16: #{tpu_custom_call.1} parent=1 // pred_region
      %s42 = ssub.s32 1024, 1024
      %43 = vsyncadd [#allocation6], %s42
      %s44 = sshll.u32 [#allocation7], 4
      %s45 = int_to_ptr.vmem [resolvable:$true] %s44
      %50 = dma.hbm_to_vmem [thread:$0]  %s3, 1024, %s45, [#allocation6], 64, 64, 4
    $region17: #{tpu_custom_call.1} parent=1 // pred_fallthru
      _
    // Predicated region
    $region18: #{tpu_custom_call.1} parent=1 // pred_check
      _
    $region19: #{tpu_custom_call.1} parent=1 // pred_check_branch
      %52 = sbr.rel (0) target = $region21
    $region20: #{tpu_custom_call.1} parent=1 // pred_region
      _
    $region21: #{tpu_custom_call.1} parent=1 // pred_fallthru
      _
    // Predicated region
    $region22: #{tpu_custom_call.1} parent=1 // pred_check
      _
    $region23: #{tpu_custom_call.1} parent=1 // pred_check_branch
      %54 = sbr.rel (0) target = $region25
    $region24: #{tpu_custom_call.1} parent=1 // pred_region
      %55 = dma.done [#allocation3], 128
    $region25: #{tpu_custom_call.1} parent=1 // pred_fallthru
      _
    // Predicated region
    $region26: #{tpu_custom_call.1} parent=1 // pred_check
      _
    $region27: #{tpu_custom_call.1} parent=1 // pred_check_branch
      %57 = sbr.rel (0) target = $region29
    $region28: #{tpu_custom_call.1} parent=1 // pred_region
      %58 = dma.done [#allocation6], 1024
    $region29: #{tpu_custom_call.1} parent=1 // pred_fallthru
      _
    // Predicated region
    $region30: #{tpu_custom_call.1} parent=1 // pred_check
      _
    $region31: #{tpu_custom_call.1} parent=1 // pred_check_branch
      %60 = sbr.rel (0) target = $region33
    $region32: #{tpu_custom_call.1} parent=1 // pred_region
      %61 = dma.done [#allocation6], 1024
    $region33: #{tpu_custom_call.1} parent=1 // pred_fallthru
      _
    %v63 = vld [vmem:[#allocation2] sm:$0xf]
    %v64 = vld [vmem:[#allocation2 + $0x4] sm:$0xf]
    %v65 = vld [vmem:[#allocation5] sm:$0xf]
    %v66 = vld [vmem:[#allocation5 + $0x4] sm:$0xf]
    %v67 = vld [vmem:[#allocation5 + $0x8] sm:$0xf]
    %v68 = vld [vmem:[#allocation5 + $0xc] sm:$0xf]
    %v69 = vld [vmem:[#allocation5 + $0x10] sm:$0xf]
    %v70 = vld [vmem:[#allocation5 + $0x14] sm:$0xf]
    %v71 = vld [vmem:[#allocation5 + $0x18] sm:$0xf]
    %v72 = vld [vmem:[#allocation5 + $0x1c] sm:$0xf]
    %v73 = vld [vmem:[#allocation5 + $0x20] sm:$0xf]
    %v74 = vld [vmem:[#allocation5 + $0x24] sm:$0xf]
    %v75 = vld [vmem:[#allocation5 + $0x28] sm:$0xf]
    %v76 = vld [vmem:[#allocation5 + $0x2c] sm:$0xf]
    %v77 = vld [vmem:[#allocation5 + $0x30] sm:$0xf]
    %v78 = vld [vmem:[#allocation5 + $0x34] sm:$0xf]
    %v79 = vld [vmem:[#allocation5 + $0x38] sm:$0xf]
    %v80 = vld [vmem:[#allocation5 + $0x3c] sm:$0xf]
    %v81 = vld [vmem:[%s2] sm:$0x1]
    %v82 = vunpack.c.l.bf16 %v81
    %v83 = vlaneseq
    %v84 = vshrl.u32 %v83, 7
    %v85 = vsub.s32 0, %v84
    %v86 = vrot.slane %v82, %v85
    %v89 = vunpack.c.l.b16 %v63
    %v90 = vunpack.c.l.b16 %v64
    %v91 = vpack.c.b16 %v90, %v89
    %v109 = vunpack.c.l.b16 %v65
    %v110 = vunpack.c.l.b16 %v66
    %v111 = vunpack.c.l.b16 %v67
    %v112 = vunpack.c.l.b16 %v68
    %v113 = vunpack.c.l.b16 %v69
    %v114 = vunpack.c.l.b16 %v70
    %v115 = vunpack.c.l.b16 %v71
    %v116 = vunpack.c.l.b16 %v72
    %v117 = vunpack.c.l.b16 %v73
    %v118 = vunpack.c.l.b16 %v74
    %v119 = vunpack.c.l.b16 %v75
    %v120 = vunpack.c.l.b16 %v76
    %v121 = vunpack.c.l.b16 %v77
    %v122 = vunpack.c.l.b16 %v78
    %v123 = vunpack.c.l.b16 %v79
    %v124 = vunpack.c.l.b16 %v80
    %v125 = vpack.c.b16 %v110, %v109
    %v126 = vpack.c.b16 %v112, %v111
    %v127 = vpack.c.b16 %v114, %v113
    %v128 = vpack.c.b16 %v116, %v115
    %v129 = vpack.c.b16 %v118, %v117
    %v130 = vpack.c.b16 %v120, %v119
    %v131 = vpack.c.b16 %v122, %v121
    %v132 = vpack.c.b16 %v124, %v123
    %141 = vmatprep.subr.bf16.mxu0 0
    %142 = vmatpush1.bf16.msra.mxu0 %v125
    %143 = vmatprep.subr.bf16.mxu0 0
    %144 = vmatpush1.bf16.msra.mxu0 %v126
    %145 = vmatprep.subr.bf16.mxu0 0
    %146 = vmatpush1.bf16.msra.mxu0 %v127
    %147 = vmatprep.subr.bf16.mxu0 0
    %148 = vmatpush1.bf16.msra.mxu0 %v128
    %149 = vmatprep.subr.bf16.mxu0 0
    %150 = vmatpush1.bf16.msra.mxu0 %v129
    %151 = vmatprep.subr.bf16.mxu0 0
    %152 = vmatpush1.bf16.msra.mxu0 %v130
    %153 = vmatprep.subr.bf16.mxu0 0
    %154 = vmatpush1.bf16.msra.mxu0 %v131
    %155 = vmatprep.subr.bf16.mxu0 0
    %156 = vmatpush1.bf16.msra.mxu0 %v132
    %157 = vmatprep.subr.bf16.mxu0 0
    %158 = vmatpush1.bf16.msra.mxu0 0
    %159 = vmatprep.subr.bf16.mxu0 0
    %160 = vmatpush1.bf16.msra.mxu0 0
    %161 = vmatprep.subr.bf16.mxu0 0
    %162 = vmatpush1.bf16.msra.mxu0 0
    %163 = vmatprep.subr.bf16.mxu0 0
    %164 = vmatpush1.bf16.msra.mxu0 0
    %165 = vmatprep.subr.bf16.mxu0 0
    %166 = vmatpush1.bf16.msra.mxu0 0
    %167 = vmatprep.subr.bf16.mxu0 0
    %168 = vmatpush1.bf16.msra.mxu0 0
    %169 = vmatprep.subr.bf16.mxu0 0
    %170 = vmatpush1.bf16.msra.mxu0 0
    %171 = vmatprep.subr.bf16.mxu0 0
    %172 = vmatpush1.bf16.msra.mxu0 0
    %173 = vmatprep.mubr.bf16.mxu0 0
    %174 = vmatmul.mubr.bf16.gmra.mrb[0].mxu0 %v91
    %v175 = vpop.f32.mrb[0].mxu0
    %v176 = vadd.f32 %v86, %v175
    %v177 = vpop.f32.mrb[0].mxu0
    %v178 = vpop.f32.mrb[0].mxu0
    %v179 = vadd.f32 %v86, %v178
    %v180 = vpop.f32.mrb[0].mxu0
    %181 = vdwg.mxu0
    %v182 = vxor.u32 %v176, 2147483648
    %v183 = vxor.u32 %v179, 2147483648
    %v184 = vmul.f32 %v182, 1.442695
    %v185 = vpow.pop %v184
    %v186 = vmul.f32 %v183, 1.442695
    %v187 = vpow.pop %v186
    %v188 = vadd.f32 %v185, 1.0
    %v189 = vadd.f32 %v187, 1.0
    %v190 = vrcp.pop %v188
    %v191 = vmul.f32 1.0, %v190
    %v192 = vrcp.pop %v189
    %v193 = vmul.f32 1.0, %v192
    %v194 = vmul.f32 %v176, %v191
    %v195 = vmul.f32 %v179, %v193
    %v196 = vpack.c.bf16 %v195, %v194
    %v197 = vld [vmem:[#allocation7] sm:$0xf]
    %v198 = vld [vmem:[#allocation7 + $0x4] sm:$0xf]
    %v199 = vld [vmem:[#allocation7 + $0x8] sm:$0xf]
    %v200 = vld [vmem:[#allocation7 + $0xc] sm:$0xf]
    %v201 = vld [vmem:[#allocation7 + $0x10] sm:$0xf]
    %v202 = vld [vmem:[#allocation7 + $0x14] sm:$0xf]
    %v203 = vld [vmem:[#allocation7 + $0x18] sm:$0xf]
    %v204 = vld [vmem:[#allocation7 + $0x1c] sm:$0xf]
    %v205 = vld [vmem:[#allocation7 + $0x20] sm:$0xf]
    %v206 = vld [vmem:[#allocation7 + $0x24] sm:$0xf]
    %v207 = vld [vmem:[#allocation7 + $0x28] sm:$0xf]
    %v208 = vld [vmem:[#allocation7 + $0x2c] sm:$0xf]
    %v209 = vld [vmem:[#allocation7 + $0x30] sm:$0xf]
    %v210 = vld [vmem:[#allocation7 + $0x34] sm:$0xf]
    %v211 = vld [vmem:[#allocation7 + $0x38] sm:$0xf]
    %v212 = vld [vmem:[#allocation7 + $0x3c] sm:$0xf]
    %v213 = vld [vmem:[%s4] sm:$0x1]
    %v214 = vunpack.c.l.bf16 %v213
    %v215 = vlaneseq
    %v216 = vshrl.u32 %v215, 7
    %v217 = vsub.s32 0, %v216
    %v218 = vrot.slane %v214, %v217
    %v235 = vunpack.c.l.b16 %v197
    %v236 = vunpack.c.l.b16 %v198
    %v237 = vunpack.c.l.b16 %v199
    %v238 = vunpack.c.l.b16 %v200
    %v239 = vunpack.c.l.b16 %v201
    %v240 = vunpack.c.l.b16 %v202
    %v241 = vunpack.c.l.b16 %v203
    %v242 = vunpack.c.l.b16 %v204
    %v243 = vunpack.c.l.b16 %v205
    %v244 = vunpack.c.l.b16 %v206
    %v245 = vunpack.c.l.b16 %v207
    %v246 = vunpack.c.l.b16 %v208
    %v247 = vunpack.c.l.b16 %v209
    %v248 = vunpack.c.l.b16 %v210
    %v249 = vunpack.c.l.b16 %v211
    %v250 = vunpack.c.l.b16 %v212
    %v251 = vpack.c.b16 %v236, %v235
    %v252 = vpack.c.b16 %v238, %v237
    %v253 = vpack.c.b16 %v240, %v239
    %v254 = vpack.c.b16 %v242, %v241
    %v255 = vpack.c.b16 %v244, %v243
    %v256 = vpack.c.b16 %v246, %v245
    %v257 = vpack.c.b16 %v248, %v247
    %v258 = vpack.c.b16 %v250, %v249
    %267 = vmatprep.subr.bf16.mxu0 0
    %268 = vmatpush1.bf16.msra.mxu0 %v251
    %269 = vmatprep.subr.bf16.mxu0 0
    %270 = vmatpush1.bf16.msra.mxu0 %v252
    %271 = vmatprep.subr.bf16.mxu0 0
    %272 = vmatpush1.bf16.msra.mxu0 %v253
    %273 = vmatprep.subr.bf16.mxu0 0
    %274 = vmatpush1.bf16.msra.mxu0 %v254
    %275 = vmatprep.subr.bf16.mxu0 0
    %276 = vmatpush1.bf16.msra.mxu0 %v255
    %277 = vmatprep.subr.bf16.mxu0 0
    %278 = vmatpush1.bf16.msra.mxu0 %v256
    %279 = vmatprep.subr.bf16.mxu0 0
    %280 = vmatpush1.bf16.msra.mxu0 %v257
    %281 = vmatprep.subr.bf16.mxu0 0
    %282 = vmatpush1.bf16.msra.mxu0 %v258
    %283 = vmatprep.subr.bf16.mxu0 0
    %284 = vmatpush1.bf16.msra.mxu0 0
    %285 = vmatprep.subr.bf16.mxu0 0
    %286 = vmatpush1.bf16.msra.mxu0 0
    %287 = vmatprep.subr.bf16.mxu0 0
    %288 = vmatpush1.bf16.msra.mxu0 0
    %289 = vmatprep.subr.bf16.mxu0 0
    %290 = vmatpush1.bf16.msra.mxu0 0
    %291 = vmatprep.subr.bf16.mxu0 0
    %292 = vmatpush1.bf16.msra.mxu0 0
    %293 = vmatprep.subr.bf16.mxu0 0
    %294 = vmatpush1.bf16.msra.mxu0 0
    %295 = vmatprep.subr.bf16.mxu0 0
    %296 = vmatpush1.bf16.msra.mxu0 0
    %297 = vmatprep.subr.bf16.mxu0 0
    %298 = vmatpush1.bf16.msra.mxu0 0
    %299 = vmatprep.mubr.bf16.mxu0 0
    %300 = vmatmul.mubr.bf16.gmra.mrb[0].mxu0 %v196
    %v301 = vpop.f32.mrb[0].mxu0
    %v302 = vadd.f32 %v218, %v301
    %v303 = vpop.f32.mrb[0].mxu0
    %v304 = vpop.f32.mrb[0].mxu0
    %v305 = vadd.f32 %v218, %v304
    %v306 = vpop.f32.mrb[0].mxu0
    %307 = vdwg.mxu0
    %308 = vst [vmem:[#allocation8] sm:$0xff] %v302
    %309 = vst [vmem:[#allocation8 + $0x8] sm:$0xff] %v305
    // Predicated region
    $region34: #{tpu_custom_call.1} parent=1 // pred_check
      _
    $region35: #{tpu_custom_call.1} parent=1 // pred_check_branch
      %311 = sbr.rel (0) target = $region37
    $region36: #{tpu_custom_call.1} parent=1 // pred_region
      %s313 = ssub.s32 256, 256
      %314 = vsyncadd [#allocation4], %s313
      %s315 = sshll.u32 [#allocation8], 4
      %s316 = int_to_ptr.vmem [resolvable:$true] %s315
      %321 = dma.vmem_to_hbm [thread:$0]  %s316, 256, %s5, [#allocation4], 128, 128, 8
    $region37: #{tpu_custom_call.1} parent=1 // pred_fallthru
      _
    // Predicated region
    $region38: #{tpu_custom_call.1} parent=1 // pred_check
      _
    $region39: #{tpu_custom_call.1} parent=1 // pred_check_branch
      %323 = sbr.rel (0) target = $region41
    $region40: #{tpu_custom_call.1} parent=1 // pred_region
      %324 = dma.done [#allocation4], 256
    $region41: #{tpu_custom_call.1} parent=1 // pred_fallthru
      _
    %325 = vsyncpa [#allocation3], 1
    %326 = vsyncpa [#allocation6], 1
    %327 = vsyncpa [#allocation4], 1

</llo_original>
